<compile_context>
chip_gen: v7x
topology: tpu7x:2x2x1
jax: 0.10.0
libtpu: 0.0.40
codegen_flags: <defaults>
</compile_context>

<pallas_src>
import functools

import jax
import jax.numpy as jnp
from jax.experimental import pallas as pl
from jax.experimental.pallas import tpu as pltpu

IN_FEATURES = 99
PADDED_IN = 128   # 99 features zero-padded to a full lane width
H1 = 128
H2 = 32


def _round_up(n, m):
    return ((n + m - 1) // m) * m


def mlp_kernel(x_ref, w1_ref, b1_ref, w2_ref, b2_ref, w3_ref, b3_ref, o_ref, xpad_ref):
    tb = x_ref.shape[0]

    # Stage the raw (tb, 99) f32 rows into a lane-aligned (tb, 128) f32 scratch.
    # The pad lanes are rewritten to zero EVERY step (cheap masked store): the scratch
    # persists across grid steps and, under megacore sharding, each core has its own
    # copy whose first step is not program_id==0, so a "zero once at step 0" guard
    # would leave garbage (possibly NaN) in lanes 99..127 on the second core.
    xpad_ref[:, IN_FEATURES:] = jnp.zeros((tb, PADDED_IN - IN_FEATURES), jnp.float32)
    xpad_ref[:, :IN_FEATURES] = x_ref[...]

    # Layer 1 (MXU): (tb, 128) @ (128, 128); MXU inputs in compute dtype (w1's dtype),
    # f32 accumulation; bias + ReLU in f32 on the VPU.
    x_cd = xpad_ref[...].astype(w1_ref.dtype)
    h1 = jnp.dot(x_cd, w1_ref[...], preferred_element_type=jnp.float32)
    h1 = jnp.maximum(h1 + b1_ref[...], 0.0)

    # Layer 2 (MXU): (tb, 128) @ (128, 32); same mixed-precision scheme.
    h2 = jnp.dot(h1.astype(w2_ref.dtype), w2_ref[...],
                 preferred_element_type=jnp.float32)
    h2 = jnp.maximum(h2 + b2_ref[...], 0.0)

    # Layer 3 (VPU + XLU): N=1 matmul replaced by elementwise multiply + lane reduction
    # over the 32 hidden lanes; frees the MXU slot entirely.
    y = jnp.sum(h2 * w3_ref[...], axis=-1, keepdims=True) + b3_ref[...]
    o_ref[...] = y.astype(o_ref.dtype)


def prepare_params(params, compute_dtype=jnp.bfloat16):
    """One-time weight prep (hoisted out of the per-call path).

    Pads w1 99->128 with zero rows (so the kernel's zero-padded x lanes contribute
    exactly 0) and casts the MXU operands to compute_dtype; biases stay f32.
    """
    w1, b1, w2, b2, w3, b3 = params
    w1_pad = jnp.zeros((PADDED_IN, H1), jnp.float32).at[:IN_FEATURES, :].set(w1)
    return (
        w1_pad.astype(compute_dtype),                 # (128, 128) MXU operand
        b1.reshape(1, H1).astype(jnp.float32),        # (1, 128)  f32 bias
        w2.astype(compute_dtype),                     # (128, 32) MXU operand
        b2.reshape(1, H2).astype(jnp.float32),        # (1, 32)   f32 bias
        w3.reshape(1, H2).astype(jnp.float32),        # (1, 32)   VPU row vector
        b3.reshape(1, 1).astype(jnp.float32),         # (1, 1)
    )


@functools.partial(jax.jit, static_argnames=("tile_b",))
def pose_panning_forward(x, prepped, *, tile_b=8192):
    """x: (B, 99) float32.  prepped: output of prepare_params.  Returns (B, 1) f32."""
    w1_p, b1_p, w2_p, b2_p, w3_p, b3_p = prepped
    x = x.astype(jnp.float32)
    B = x.shape[0]

    # Row tile: multiple of 8 (f32 sublane); large tiles amortize the per-grid-step
    # overhead.  Partial last blocks (B % tb != 0) are handled by Pallas: out-of-range
    # input rows are unspecified but their output rows are never written back.
    tb = min(tile_b, _round_up(B, 8))
    grid = (pl.cdiv(B, tb),)

    return pl.pallas_call(
        mlp_kernel,
        out_shape=jax.ShapeDtypeStruct((B, 1), jnp.float32),
        grid=grid,
        in_specs=[
            # Raw x rows, pipelined/double-buffered; last dim 99 == full array dim.
            pl.BlockSpec((tb, IN_FEATURES), lambda i: (i, 0)),
            # Weights / biases: constant index maps -> VMEM-resident across all steps.
            pl.BlockSpec((PADDED_IN, H1), lambda i: (0, 0)),   # w1 (padded)
            pl.BlockSpec((1, H1), lambda i: (0, 0)),           # b1
            pl.BlockSpec((H1, H2), lambda i: (0, 0)),          # w2
            pl.BlockSpec((1, H2), lambda i: (0, 0)),           # b2
            pl.BlockSpec((1, H2), lambda i: (0, 0)),           # w3 row
            pl.BlockSpec((1, 1), lambda i: (0, 0)),            # b3
        ],
        out_specs=pl.BlockSpec((tb, 1), lambda i: (i, 0)),
        scratch_shapes=[pltpu.VMEM((tb, PADDED_IN), jnp.float32)],  # x staging pad
        compiler_params=pltpu.CompilerParams(
            dimension_semantics=("parallel",),          # shard batch tiles over v7x TCs
            vmem_limit_bytes=48 * 1024 * 1024,          # headroom on v5e (16 MiB default)
        ),
    )(x, w1_p, b1_p, w2_p, b2_p, w3_p, b3_p)


# ---------------------------------------------------------------------------------------
# Parameter init + references
# ---------------------------------------------------------------------------------------
def init_params(key):
    # Mimics nn.Linear default init: U(-1/sqrt(fan_in), +1/sqrt(fan_in)).
    ks = jax.random.split(key, 6)

    def linear(kw, kb, fan_in, fan_out):
        bound = 1.0 / jnp.sqrt(fan_in)
        w = jax.random.uniform(kw, (fan_in, fan_out), jnp.float32, -bound, bound)
        b = jax.random.uniform(kb, (1, fan_out), jnp.float32, -bound, bound)
        return w, b

    w1, b1 = linear(ks[0], ks[1], IN_FEATURES, H1)
    w2, b2 = linear(ks[2], ks[3], H1, H2)
    w3, b3 = linear(ks[4], ks[5], H2, 1)
    return (w1, b1, w2, b2, w3, b3)


def reference_forward(x, params):
    """Exact f32 reference matching the PyTorch module."""
    w1, b1, w2, b2, w3, b3 = params
    mm = lambda a, b: jnp.dot(a, b, precision=jax.lax.Precision.HIGHEST)
    h = jnp.maximum(mm(x, w1) + b1, 0.0)
    h = jnp.maximum(mm(h, w2) + b2, 0.0)
    return mm(h, w3) + b3


def reference_forward_like_kernel(x, params, compute_dtype):
    """Mirrors the kernel's scheme: compute_dtype MXU inputs, f32 accumulate/bias/ReLU."""
    w1, b1, w2, b2, w3, b3 = params
    q = lambda a: a.astype(compute_dtype).astype(jnp.float32)
    mm = lambda a, b: jnp.dot(a, b, precision=jax.lax.Precision.HIGHEST)
    h1 = jnp.maximum(mm(q(x), q(w1)) + b1, 0.0)
    h2 = jnp.maximum(mm(q(h1), q(w2)) + b2, 0.0)
    return jnp.sum(h2 * w3.reshape(1, -1), axis=-1, keepdims=True) + b3


if __name__ == "__main__":
    key = jax.random.PRNGKey(0)
    k_params, k_x = jax.random.split(key)

    params = init_params(k_params)
    x = jax.random.normal(k_x, (8, 99), dtype=jnp.float32)  # batch=8, features=99

    # Recommended config: bf16 MXU inputs, f32 accumulation / elementwise.
    prepped_bf16 = prepare_params(params, jnp.bfloat16)
    out_bf16 = jax.block_until_ready(pose_panning_forward(x, prepped_bf16))
    assert out_bf16.shape == (8, 1), out_bf16.shape
    ref_bf16 = reference_forward_like_kernel(x, params, jnp.bfloat16)
    assert jnp.allclose(out_bf16, ref_bf16, atol=1e-3, rtol=1e-3), "bf16 path mismatch"

    # Exact f32 path vs the true module semantics.
    prepped_f32 = prepare_params(params, jnp.float32)
    out_f32 = jax.block_until_ready(pose_panning_forward(x, prepped_f32))
    ref_f32 = reference_forward(x, params)
    assert out_f32.shape == (8, 1), out_f32.shape
    assert jnp.allclose(out_f32, ref_f32, atol=2e-4, rtol=2e-4), "f32 path mismatch"

    print("KERNEL_OK")
</pallas_src>

<mosaic_0001>
module attributes {stable_mosaic.version = 11 : i64} {
  func.func @mlp_kernel(%arg0: i32, %arg1: memref<8x99xf32, #tpu.memory_space<vmem>>, %arg2: memref<128x128xbf16, #tpu.memory_space<vmem>>, %arg3: memref<1x128xf32, #tpu.memory_space<vmem>>, %arg4: memref<128x32xbf16, #tpu.memory_space<vmem>>, %arg5: memref<1x32xf32, #tpu.memory_space<vmem>>, %arg6: memref<1x32xf32, #tpu.memory_space<vmem>>, %arg7: memref<1x1xf32, #tpu.memory_space<vmem>>, %arg8: memref<8x1xf32, #tpu.memory_space<vmem>>, %arg9: memref<8x128xf32, #tpu.memory_space<vmem>>) attributes {dimension_semantics = [#tpu.dimension_semantics<parallel>], iteration_bounds = array<i64: 1>, scalar_prefetch = 0 : i64, scratch_operands = 1 : i64, tpu.core_type = #tpu.core_type<tc>, window_params = [{transform_indices = @transform_0, window_bounds = array<i64: 8, 99>}, {pipeline_mode = #tpu.pipeline_mode<synchronous>, transform_indices = @transform_1, window_bounds = array<i64: 128, 128>}, {pipeline_mode = #tpu.pipeline_mode<synchronous>, transform_indices = @transform_2, window_bounds = array<i64: 1, 128>}, {pipeline_mode = #tpu.pipeline_mode<synchronous>, transform_indices = @transform_3, window_bounds = array<i64: 128, 32>}, {pipeline_mode = #tpu.pipeline_mode<synchronous>, transform_indices = @transform_4, window_bounds = array<i64: 1, 32>}, {pipeline_mode = #tpu.pipeline_mode<synchronous>, transform_indices = @transform_5, window_bounds = array<i64: 1, 32>}, {pipeline_mode = #tpu.pipeline_mode<synchronous>, transform_indices = @transform_6, window_bounds = array<i64: 1, 1>}, {transform_indices = @transform_7, window_bounds = array<i64: 8, 1>}]} {
    %cst = arith.constant 0.000000e+00 : f32
    %0 = vector.broadcast %cst : f32 to vector<8x29xf32>
    %c0 = arith.constant 0 : index
    %c99 = arith.constant 99 : index
    %1 = vector.load %arg9[%c0, %c99] : memref<8x128xf32, #tpu.memory_space<vmem>>, vector<8x29xf32>
    tpu.vector_store %arg9[%c0, %c99], %0 {strides = array<i32>} : memref<8x128xf32, #tpu.memory_space<vmem>>, vector<8x29xf32>,
    %c0_0 = arith.constant 0 : index
    %c0_1 = arith.constant 0 : index
    %2 = vector.load %arg1[%c0_0, %c0_1] : memref<8x99xf32, #tpu.memory_space<vmem>>, vector<8x99xf32>
    %c0_2 = arith.constant 0 : index
    %c0_3 = arith.constant 0 : index
    %3 = vector.load %arg9[%c0_2, %c0_3] : memref<8x128xf32, #tpu.memory_space<vmem>>, vector<8x99xf32>
    tpu.vector_store %arg9[%c0_2, %c0_3], %2 {strides = array<i32>} : memref<8x128xf32, #tpu.memory_space<vmem>>, vector<8x99xf32>,
    %c0_4 = arith.constant 0 : index
    %c0_5 = arith.constant 0 : index
    %4 = vector.load %arg9[%c0_4, %c0_5] : memref<8x128xf32, #tpu.memory_space<vmem>>, vector<8x128xf32>
    %5 = arith.truncf %4 : vector<8x128xf32> to vector<8x128xbf16>
    %c0_6 = arith.constant 0 : index
    %c0_7 = arith.constant 0 : index
    %6 = vector.load %arg2[%c0_6, %c0_7] : memref<128x128xbf16, #tpu.memory_space<vmem>>, vector<128x128xbf16>
    %cst_8 = arith.constant dense<0.000000e+00> : vector<8x128xf32>
    %7 = tpu.matmul %5, %6, %cst_8 {dimension_numbers = #tpu.dot_dimension_numbers<[1], [0], [0], [1], [0, 0, 1, 1], [], []>} : vector<8x128xbf16>, vector<128x128xbf16>, vector<8x128xf32> -> vector<8x128xf32>
    %c0_9 = arith.constant 0 : index
    %c0_10 = arith.constant 0 : index
    %8 = vector.load %arg3[%c0_9, %c0_10] : memref<1x128xf32, #tpu.memory_space<vmem>>, vector<1x128xf32>
    %9 = vector.broadcast %8 : vector<1x128xf32> to vector<8x128xf32>
    %10 = arith.addf %7, %9 : vector<8x128xf32>
    %cst_11 = arith.constant 0.000000e+00 : f32
    %11 = vector.broadcast %cst_11 : f32 to vector<8x128xf32>
    %12 = arith.maximumf %10, %11 : vector<8x128xf32>
    %13 = arith.truncf %12 : vector<8x128xf32> to vector<8x128xbf16>
    %c0_12 = arith.constant 0 : index
    %c0_13 = arith.constant 0 : index
    %14 = vector.load %arg4[%c0_12, %c0_13] : memref<128x32xbf16, #tpu.memory_space<vmem>>, vector<128x32xbf16>
    %cst_14 = arith.constant dense<0.000000e+00> : vector<8x32xf32>
    %15 = tpu.matmul %13, %14, %cst_14 {dimension_numbers = #tpu.dot_dimension_numbers<[1], [0], [0], [1], [0, 0, 1, 1], [], []>} : vector<8x128xbf16>, vector<128x32xbf16>, vector<8x32xf32> -> vector<8x32xf32>
    %c0_15 = arith.constant 0 : index
    %c0_16 = arith.constant 0 : index
    %16 = vector.load %arg5[%c0_15, %c0_16] : memref<1x32xf32, #tpu.memory_space<vmem>>, vector<1x32xf32>
    %17 = vector.broadcast %16 : vector<1x32xf32> to vector<8x32xf32>
    %18 = arith.addf %15, %17 : vector<8x32xf32>
    %cst_17 = arith.constant 0.000000e+00 : f32
    %19 = vector.broadcast %cst_17 : f32 to vector<8x32xf32>
    %20 = arith.maximumf %18, %19 : vector<8x32xf32>
    %c0_18 = arith.constant 0 : index
    %c0_19 = arith.constant 0 : index
    %21 = vector.load %arg6[%c0_18, %c0_19] : memref<1x32xf32, #tpu.memory_space<vmem>>, vector<1x32xf32>
    %22 = vector.broadcast %21 : vector<1x32xf32> to vector<8x32xf32>
    %23 = arith.mulf %20, %22 : vector<8x32xf32>
    %cst_20 = arith.constant dense<0.000000e+00> : vector<8xf32>
    %24 = vector.multi_reduction <add>, %23, %cst_20 [1] : vector<8x32xf32> to vector<8xf32>
    %25 = vector.shape_cast %24 : vector<8xf32> to vector<8x1xf32>
    %c0_21 = arith.constant 0 : index
    %c0_22 = arith.constant 0 : index
    %26 = vector.load %arg7[%c0_21, %c0_22] : memref<1x1xf32, #tpu.memory_space<vmem>>, vector<1x1xf32>
    %27 = vector.broadcast %26 : vector<1x1xf32> to vector<8x1xf32>
    %28 = arith.addf %25, %27 : vector<8x1xf32>
    %c0_23 = arith.constant 0 : index
    %c0_24 = arith.constant 0 : index
    %29 = vector.load %arg8[%c0_23, %c0_24] : memref<8x1xf32, #tpu.memory_space<vmem>>, vector<8x1xf32>
    tpu.vector_store %arg8[%c0_23, %c0_24], %28 {strides = array<i32>} : memref<8x1xf32, #tpu.memory_space<vmem>>, vector<8x1xf32>,
    return
  }
  func.func @transform_0(%arg0: i32) -> (i32, i32) {
    %c0_i32 = arith.constant 0 : i32
    %c0_i32_0 = arith.constant 0 : i32
    return %arg0, %c0_i32 : i32, i32
  }
  func.func @transform_1(%arg0: i32) -> (i32, i32) {
    %c0_i32 = arith.constant 0 : i32
    %c0_i32_0 = arith.constant 0 : i32
    %c0_i32_1 = arith.constant 0 : i32
    return %c0_i32, %c0_i32_0 : i32, i32
  }
  func.func @transform_2(%arg0: i32) -> (i32, i32) {
    %c0_i32 = arith.constant 0 : i32
    %c0_i32_0 = arith.constant 0 : i32
    %c0_i32_1 = arith.constant 0 : i32
    return %c0_i32, %c0_i32_0 : i32, i32
  }
  func.func @transform_3(%arg0: i32) -> (i32, i32) {
    %c0_i32 = arith.constant 0 : i32
    %c0_i32_0 = arith.constant 0 : i32
    %c0_i32_1 = arith.constant 0 : i32
    return %c0_i32, %c0_i32_0 : i32, i32
  }
  func.func @transform_4(%arg0: i32) -> (i32, i32) {
    %c0_i32 = arith.constant 0 : i32
    %c0_i32_0 = arith.constant 0 : i32
    %c0_i32_1 = arith.constant 0 : i32
    return %c0_i32, %c0_i32_0 : i32, i32
  }
  func.func @transform_5(%arg0: i32) -> (i32, i32) {
    %c0_i32 = arith.constant 0 : i32
    %c0_i32_0 = arith.constant 0 : i32
    %c0_i32_1 = arith.constant 0 : i32
    return %c0_i32, %c0_i32_0 : i32, i32
  }
  func.func @transform_6(%arg0: i32) -> (i32, i32) {
    %c0_i32 = arith.constant 0 : i32
    %c0_i32_0 = arith.constant 0 : i32
    %c0_i32_1 = arith.constant 0 : i32
    return %c0_i32, %c0_i32_0 : i32, i32
  }
  func.func @transform_7(%arg0: i32) -> (i32, i32) {
    %c0_i32 = arith.constant 0 : i32
    %c0_i32_0 = arith.constant 0 : i32
    return %arg0, %c0_i32 : i32, i32
  }
}

</mosaic_0001>

<llo_original>
// kernel: pose_panning_forward.1
$region0: #{pose_panning_forward.1}
  #allocation0 [shape = 'u32[]', space=smem, size = 0x4, offset = 0x4, fixed_abs, tag = 'smem constant byte address 0x4 - core index']
  #allocation1 [shape = 'u32[144,128]{1,0:T(1,128)}', space=vmem, size = 0x12000, scoped, tag = 'internal scratch']
  #allocation2 [shape = 'f32[8,128]{1,0:T(8,128)}', space=vmem, size = 0x1000, scoped, tag = 'scratch operand']
  #allocation3 [shape = 'f32[1,1]{1,0:T(1,128)S(1)}', space=vmem, size = 0x200, scoped, tag = 'scoped memory for pose_panning_forward.1']
  %s0 = inlined_call_operand.vmem [shape: f32[8,99], index: 0, kind: input, shape index: {}]
  %s1 = inlined_call_operand.vmem [shape: bf16[128,128], index: 1, kind: input, shape index: {}]
  %s2 = inlined_call_operand.vmem [shape: f32[1,128], index: 2, kind: input, shape index: {}]
  %s3 = inlined_call_operand.vmem [shape: bf16[128,32], index: 3, kind: input, shape index: {}]
  %s4 = inlined_call_operand.vmem [shape: f32[1,32], index: 4, kind: input, shape index: {}]
  %s5 = inlined_call_operand.vmem [shape: f32[1,32], index: 5, kind: input, shape index: {}]
  %s6 = inlined_call_operand.<no memory space> [shape: f32[1,1], index: 6, kind: input, shape index: {}]
  %s7 = inlined_call_operand.vmem [shape: f32[8,1], index: 7, kind: output, shape index: {}]
  %s8 = sld [smem:[#allocation0]]
  $region38: #{pose_panning_forward.1} parent=0
    _
  %s10 = ssub.s32 1, %s8
  %s11 = scalar_select 0, %s10, %s8
  %v12 = vstv %s6
  %13 = vst [vmem:[#allocation3] sm:$0x1] %v12
  // Predicated region
  $region2: #{pose_panning_forward.1} parent=0 // pred_check
    _
  $region3: #{pose_panning_forward.1} parent=0 // pred_check_branch
    %15 = sbr.rel (0) target = $region5
  $region4: #{pose_panning_forward.1} parent=0 // pred_region
    _
  $region5: #{pose_panning_forward.1} parent=0 // pred_fallthru
    _
  // Predicated region
  $region6: #{pose_panning_forward.1} parent=0 // pred_check
    _
  $region7: #{pose_panning_forward.1} parent=0 // pred_check_branch
    %17 = sbr.rel (0) target = $region9
  $region8: #{pose_panning_forward.1} parent=0 // pred_region
    _
  $region9: #{pose_panning_forward.1} parent=0 // pred_fallthru
    _
  // Predicated region
  $region10: #{pose_panning_forward.1} parent=0 // pred_check
    _
  $region11: #{pose_panning_forward.1} parent=0 // pred_check_branch
    %19 = sbr.rel (0) target = $region13
  $region12: #{pose_panning_forward.1} parent=0 // pred_region
    _
  $region13: #{pose_panning_forward.1} parent=0 // pred_fallthru
    _
  // Predicated region
  $region14: #{pose_panning_forward.1} parent=0 // pred_check
    _
  $region15: #{pose_panning_forward.1} parent=0 // pred_check_branch
    %21 = sbr.rel (0) target = $region17
  $region16: #{pose_panning_forward.1} parent=0 // pred_region
    _
  $region17: #{pose_panning_forward.1} parent=0 // pred_fallthru
    _
  // Predicated region
  $region18: #{pose_panning_forward.1} parent=0 // pred_check
    _
  $region19: #{pose_panning_forward.1} parent=0 // pred_check_branch
    %23 = sbr.rel (0) target = $region21
  $region20: #{pose_panning_forward.1} parent=0 // pred_region
    _
  $region21: #{pose_panning_forward.1} parent=0 // pred_fallthru
    _
  // Predicated region
  $region22: #{pose_panning_forward.1} parent=0 // pred_check
    _
  $region23: #{pose_panning_forward.1} parent=0 // pred_check_branch
    %25 = sbr.rel (0) target = $region25
  $region24: #{pose_panning_forward.1} parent=0 // pred_region
    _
  $region25: #{pose_panning_forward.1} parent=0 // pred_fallthru
    _
  // Predicated region
  $region26: #{pose_panning_forward.1} parent=0 // pred_check
    _
  $region27: #{pose_panning_forward.1} parent=0 // pred_check_branch
    %27 = sbr.rel (0) target = $region29
  $region28: #{pose_panning_forward.1} parent=0 // pred_region
    _
  $region29: #{pose_panning_forward.1} parent=0 // pred_fallthru
    _
  %vm29 = vcmask 1048344
  %30 = vst.msk [vmem:[#allocation2] sm:$0xff] %vm29, 0.0
  %v31 = vld [vmem:[%s0] sm:$0xff]
  %vm32 = vcmask 809984
  %33 = vst.msk [vmem:[#allocation2] sm:$0xff] %vm32, %v31
  %v34 = vld [vmem:[#allocation2] sm:$0xff]
  %v35 = vpack.c.bf16 %v34, %v34
  %v36 = vld [vmem:[%s1] sm:$0xf]
  %v37 = vld [vmem:[%s1 + $0x4] sm:$0xf]
  %v38 = vld [vmem:[%s1 + $0x8] sm:$0xf]
  %v39 = vld [vmem:[%s1 + $0xc] sm:$0xf]
  %v40 = vld [vmem:[%s1 + $0x10] sm:$0xf]
  %v41 = vld [vmem:[%s1 + $0x14] sm:$0xf]
  %v42 = vld [vmem:[%s1 + $0x18] sm:$0xf]
  %v43 = vld [vmem:[%s1 + $0x1c] sm:$0xf]
  %v44 = vld [vmem:[%s1 + $0x20] sm:$0xf]
  %v45 = vld [vmem:[%s1 + $0x24] sm:$0xf]
  %v46 = vld [vmem:[%s1 + $0x28] sm:$0xf]
  %v47 = vld [vmem:[%s1 + $0x2c] sm:$0xf]
  %v48 = vld [vmem:[%s1 + $0x30] sm:$0xf]
  %v49 = vld [vmem:[%s1 + $0x34] sm:$0xf]
  %v50 = vld [vmem:[%s1 + $0x38] sm:$0xf]
  %v51 = vld [vmem:[%s1 + $0x3c] sm:$0xf]
  %v52 = vld [vmem:[%s2] sm:$0x1]
  %v54 = vlaneseq
  %v55 = vshrl.u32 %v54, 7
  %v56 = vsub.s32 0, %v55
  %v57 = vrot.slane %v52, %v56
  %v75 = vunpack.c.l.b16 %v36
  %v76 = vunpack.c.l.b16 %v37
  %v77 = vunpack.c.l.b16 %v38
  %v78 = vunpack.c.l.b16 %v39
  %v79 = vunpack.c.l.b16 %v40
  %v80 = vunpack.c.l.b16 %v41
  %v81 = vunpack.c.l.b16 %v42
  %v82 = vunpack.c.l.b16 %v43
  %v83 = vunpack.c.l.b16 %v44
  %v84 = vunpack.c.l.b16 %v45
  %v85 = vunpack.c.l.b16 %v46
  %v86 = vunpack.c.l.b16 %v47
  %v87 = vunpack.c.l.b16 %v48
  %v88 = vunpack.c.l.b16 %v49
  %v89 = vunpack.c.l.b16 %v50
  %v90 = vunpack.c.l.b16 %v51
  %v91 = vpack.c.b16 %v76, %v75
  %v92 = vpack.c.b16 %v78, %v77
  %v93 = vpack.c.b16 %v80, %v79
  %v94 = vpack.c.b16 %v82, %v81
  %v95 = vpack.c.b16 %v84, %v83
  %v96 = vpack.c.b16 %v86, %v85
  %v97 = vpack.c.b16 %v88, %v87
  %v98 = vpack.c.b16 %v90, %v89
  %107 = vmatprep.subr.bf16.mxu0 0
  %108 = vmatpush1.bf16.msra.mxu0 %v91
  %109 = vmatprep.subr.bf16.mxu0 0
  %110 = vmatpush1.bf16.msra.mxu0 %v92
  %111 = vmatprep.subr.bf16.mxu0 0
  %112 = vmatpush1.bf16.msra.mxu0 %v93
  %113 = vmatprep.subr.bf16.mxu0 0
  %114 = vmatpush1.bf16.msra.mxu0 %v94
  %115 = vmatprep.subr.bf16.mxu0 0
  %116 = vmatpush1.bf16.msra.mxu0 %v95
  %117 = vmatprep.subr.bf16.mxu0 0
  %118 = vmatpush1.bf16.msra.mxu0 %v96
  %119 = vmatprep.subr.bf16.mxu0 0
  %120 = vmatpush1.bf16.msra.mxu0 %v97
  %121 = vmatprep.subr.bf16.mxu0 0
  %122 = vmatpush1.bf16.msra.mxu0 %v98
  %123 = vmatprep.subr.bf16.mxu0 0
  %124 = vmatpush1.bf16.msra.mxu0 0
  %125 = vmatprep.subr.bf16.mxu0 0
  %126 = vmatpush1.bf16.msra.mxu0 0
  %127 = vmatprep.subr.bf16.mxu0 0
  %128 = vmatpush1.bf16.msra.mxu0 0
  %129 = vmatprep.subr.bf16.mxu0 0
  %130 = vmatpush1.bf16.msra.mxu0 0
  %131 = vmatprep.subr.bf16.mxu0 0
  %132 = vmatpush1.bf16.msra.mxu0 0
  %133 = vmatprep.subr.bf16.mxu0 0
  %134 = vmatpush1.bf16.msra.mxu0 0
  %135 = vmatprep.subr.bf16.mxu0 0
  %136 = vmatpush1.bf16.msra.mxu0 0
  %137 = vmatprep.subr.bf16.mxu0 0
  %138 = vmatpush1.bf16.msra.mxu0 0
  %139 = vmatprep.mubr.bf16.mxu0 0
  %140 = vmatmul.mubr.bf16.gmra.mrb[0].mxu0 %v35
  %v141 = vpop.f32.mrb[0].mxu0
  %v142 = vadd.f32 %v57, %v141
  %v143 = vpop.f32.mrb[0].mxu0
  %v144 = vpop.f32.mrb[0].mxu0
  %v145 = vpop.f32.mrb[0].mxu0
  %146 = vdwg.mxu0
  %v147 = vmax.f32 %v142, 0.0
  %v148 = vpack.c.bf16 %v147, %v147
  %v149 = vld [vmem:[%s3] sm:$0xf]
  %v150 = vld [vmem:[%s3 + $0x4] sm:$0xf]
  %v151 = vld [vmem:[%s3 + $0x8] sm:$0xf]
  %v152 = vld [vmem:[%s3 + $0xc] sm:$0xf]
  %v153 = vld [vmem:[%s3 + $0x10] sm:$0xf]
  %v154 = vld [vmem:[%s3 + $0x14] sm:$0xf]
  %v155 = vld [vmem:[%s3 + $0x18] sm:$0xf]
  %v156 = vld [vmem:[%s3 + $0x1c] sm:$0xf]
  %v157 = vld [vmem:[%s3 + $0x20] sm:$0xf]
  %v158 = vld [vmem:[%s3 + $0x24] sm:$0xf]
  %v159 = vld [vmem:[%s3 + $0x28] sm:$0xf]
  %v160 = vld [vmem:[%s3 + $0x2c] sm:$0xf]
  %v161 = vld [vmem:[%s3 + $0x30] sm:$0xf]
  %v162 = vld [vmem:[%s3 + $0x34] sm:$0xf]
  %v163 = vld [vmem:[%s3 + $0x38] sm:$0xf]
  %v164 = vld [vmem:[%s3 + $0x3c] sm:$0xf]
  %v165 = vld [vmem:[%s4] sm:$0x1]
  %v167 = vlaneseq
  %v168 = vshrl.u32 %v167, 7
  %v169 = vsub.s32 0, %v168
  %v170 = vrot.slane %v165, %v169
  %v188 = vunpack.c.l.b16 %v149
  %v189 = vunpack.c.l.b16 %v150
  %v190 = vunpack.c.l.b16 %v151
  %v191 = vunpack.c.l.b16 %v152
  %v192 = vunpack.c.l.b16 %v153
  %v193 = vunpack.c.l.b16 %v154
  %v194 = vunpack.c.l.b16 %v155
  %v195 = vunpack.c.l.b16 %v156
  %v196 = vunpack.c.l.b16 %v157
  %v197 = vunpack.c.l.b16 %v158
  %v198 = vunpack.c.l.b16 %v159
  %v199 = vunpack.c.l.b16 %v160
  %v200 = vunpack.c.l.b16 %v161
  %v201 = vunpack.c.l.b16 %v162
  %v202 = vunpack.c.l.b16 %v163
  %v203 = vunpack.c.l.b16 %v164
  %v204 = vpack.c.b16 %v189, %v188
  %v205 = vpack.c.b16 %v191, %v190
  %v206 = vpack.c.b16 %v193, %v192
  %v207 = vpack.c.b16 %v195, %v194
  %v208 = vpack.c.b16 %v197, %v196
  %v209 = vpack.c.b16 %v199, %v198
  %v210 = vpack.c.b16 %v201, %v200
  %v211 = vpack.c.b16 %v203, %v202
  %220 = vmatprep.subr.bf16.mxu0 0
  %221 = vmatpush1.bf16.msra.mxu0 %v204
  %222 = vmatprep.subr.bf16.mxu0 0
  %223 = vmatpush1.bf16.msra.mxu0 %v205
  %224 = vmatprep.subr.bf16.mxu0 0
  %225 = vmatpush1.bf16.msra.mxu0 %v206
  %226 = vmatprep.subr.bf16.mxu0 0
  %227 = vmatpush1.bf16.msra.mxu0 %v207
  %228 = vmatprep.subr.bf16.mxu0 0
  %229 = vmatpush1.bf16.msra.mxu0 %v208
  %230 = vmatprep.subr.bf16.mxu0 0
  %231 = vmatpush1.bf16.msra.mxu0 %v209
  %232 = vmatprep.subr.bf16.mxu0 0
  %233 = vmatpush1.bf16.msra.mxu0 %v210
  %234 = vmatprep.subr.bf16.mxu0 0
  %235 = vmatpush1.bf16.msra.mxu0 %v211
  %236 = vmatprep.subr.bf16.mxu0 0
  %237 = vmatpush1.bf16.msra.mxu0 0
  %238 = vmatprep.subr.bf16.mxu0 0
  %239 = vmatpush1.bf16.msra.mxu0 0
  %240 = vmatprep.subr.bf16.mxu0 0
  %241 = vmatpush1.bf16.msra.mxu0 0
  %242 = vmatprep.subr.bf16.mxu0 0
  %243 = vmatpush1.bf16.msra.mxu0 0
  %244 = vmatprep.subr.bf16.mxu0 0
  %245 = vmatpush1.bf16.msra.mxu0 0
  %246 = vmatprep.subr.bf16.mxu0 0
  %247 = vmatpush1.bf16.msra.mxu0 0
  %248 = vmatprep.subr.bf16.mxu0 0
  %249 = vmatpush1.bf16.msra.mxu0 0
  %250 = vmatprep.subr.bf16.mxu0 0
  %251 = vmatpush1.bf16.msra.mxu0 0
  %252 = vmatprep.mubr.bf16.mxu0 0
  %253 = vmatmul.mubr.bf16.gmra.mrb[0].mxu0 %v148
  %v254 = vpop.f32.mrb[0].mxu0
  %v255 = vadd.f32 %v170, %v254
  %v256 = vpop.f32.mrb[0].mxu0
  %v257 = vpop.f32.mrb[0].mxu0
  %v258 = vpop.f32.mrb[0].mxu0
  %259 = vdwg.mxu0
  %v260 = vmax.f32 %v255, 0.0
  %v261 = vld [vmem:[%s5] sm:$0x1]
  %v263 = vlaneseq
  %v264 = vshrl.u32 %v263, 7
  %v265 = vsub.s32 0, %v264
  %v266 = vrot.slane %v261, %v265
  %v268 = vmul.f32 %v260, %v266
  %vm269 = vcmask 261120
  %v270 = vsel %vm269, %v268, 0.0
  %271 = vadd.xlane.f32.xlu0 %v270
  %v272 = vpop.xlane.xlu0 %271
  %v273 = vld [vmem:[#allocation3] sm:$0x1]
  %v275 = vlaneseq
  %v276 = vshrl.u32 %v275, 7
  %v277 = vsub.s32 0, %v276
  %v278 = vrot.slane %v273, %v277
  %v280 = vadd.f32 %v272, %v278
  %vm281 = vcmask 7168
  %282 = vst.msk [vmem:[%s7] sm:$0xff] %vm281, %v280
  // Predicated region
  $region30: #{pose_panning_forward.1} parent=0 // pred_check
    _
  $region31: #{pose_panning_forward.1} parent=0 // pred_check_branch
    %284 = sbr.rel (0) target = $region33
  $region32: #{pose_panning_forward.1} parent=0 // pred_region
    _
  $region33: #{pose_panning_forward.1} parent=0 // pred_fallthru
    _
  // Predicated region
  $region34: #{pose_panning_forward.1} parent=0 // pred_check
    _
  $region35: #{pose_panning_forward.1} parent=0 // pred_check_branch
    %286 = sbr.rel (0) target = $region37
  $region36: #{pose_panning_forward.1} parent=0 // pred_region
    _
  $region37: #{pose_panning_forward.1} parent=0 // pred_fallthru
    _

</llo_original>
